<compile_context>
chip_gen: v7x
topology: tpu7x:2x2x1
jax: 0.10.0
libtpu: 0.0.40
codegen_flags: <defaults>
</compile_context>

<pallas_src>
import jax
import jax.numpy as jnp
from jax.experimental import pallas as pl
from jax.experimental.pallas import tpu as pltpu

_LANE = 128
_SUBLANE = 8
_TK_TARGET = 2048      # reduction-tile target: W1 tile = tk*H*2 B (small)
_TM_MAX = 1024         # max batch tile; bs <= _TM_MAX => W1 streamed once


def _round_up(x, m):
    return ((x + m - 1) // m) * m


def _choose_k_tiling(n_items):
    """Pad n_items so the reduction tile is either the whole axis or 2048."""
    k128 = _round_up(n_items, _LANE)
    if k128 <= _TK_TARGET:
        return k128, k128                    # single reduction step
    k_pad = _round_up(n_items, _TK_TARGET)
    return k_pad, _TK_TARGET


def _choose_m_tiling(bs):
    """Single batch tile whenever possible (=> W1 streamed exactly once)."""
    m8 = _round_up(bs, _SUBLANE)
    if m8 <= _TM_MAX:
        return m8, m8
    m_pad = _round_up(bs, _TM_MAX)
    return m_pad, _TM_MAX


def _vmem_cap_bytes():
    """3/4 of physical VMEM (generation-aware: ~48 MiB v7x, ~96 MiB v5e/v6e)."""
    try:
        phys = int(pltpu.get_tpu_info().vmem_capacity_bytes)
    except Exception:
        phys = 64 * 1024 * 1024
    return (phys * 3) // 4


# ------------------------------- the kernel -------------------------------

def _vpr_kernel(ui_ref, w1_ref, b1_ref, wmu_ref, wlv_ref, bmu_ref, blv_ref,
                eps_ref, item_ref, score_ref, mu_ref, logvar_ref, acc_ref):
    kk = pl.program_id(1)

    # ---- streaming reduction over n_items: acc += ui_tile @ W1_tile ----
    @pl.when(kk == 0)
    def _init():
        acc_ref[...] = jnp.zeros_like(acc_ref)

    acc_ref[...] += jnp.dot(ui_ref[...], w1_ref[...],
                            preferred_element_type=jnp.float32)

    # ---- finalize on the last reduction step ----
    @pl.when(kk == pl.num_programs(1) - 1)
    def _finalize():
        h1 = jnp.maximum(acc_ref[...] + b1_ref[...], 0.0)
        mu = jnp.dot(h1, wmu_ref[...],
                     preferred_element_type=jnp.float32) + bmu_ref[...]
        logvar = jnp.dot(h1, wlv_ref[...],
                         preferred_element_type=jnp.float32) + blv_ref[...]
        # reparameterize: user = mu + exp(0.5*logvar) * eps
        user = mu + jnp.exp(0.5 * logvar) * eps_ref[...]
        # score on the VPU (broadcast multiply) + lane reduce.
        score_ref[...] = jnp.sum(item_ref[...] * user[:, None, :], axis=-1)
        mu_ref[...] = mu
        logvar_ref[...] = logvar


def vpr_pallas_forward(user_items, w1, b1, w_mu, w_logvar, b_mu, b_logvar,
                       eps, item_emb):
    """Fused VPR forward.

    user_items : (bs, n_items) float (0/1)  -> cast to bf16 here (exact)
    w1         : (k_pad, h_pad) bf16        (padded in make_params)
    b1         : (1, h_pad) f32
    w_mu/w_logvar : (h_pad, E) f32
    b_mu/b_logvar : (1, E) f32
    eps        : (bs, E) f32
    item_emb   : (bs, n_k, E) f32
    Returns score (bs, n_k), mu (bs, E), logvar (bs, E).
    """
    bs, n_items = user_items.shape
    k_pad, h_pad = w1.shape
    e_dim = w_mu.shape[1]
    n_k = item_emb.shape[1]

    m_pad, tm = _choose_m_tiling(bs)
    tk = k_pad if k_pad <= _TK_TARGET else _TK_TARGET
    assert k_pad % tk == 0 and m_pad % tm == 0

    # Pad batch and n_items; zero padding is numerically exact.
    ui = jnp.pad(user_items.astype(jnp.bfloat16),
                 ((0, m_pad - bs), (0, k_pad - n_items)))
    eps_p = jnp.pad(eps, ((0, m_pad - bs), (0, 0)))
    item_p = jnp.pad(item_emb, ((0, m_pad - bs), (0, 0), (0, 0)))

    m_tiles, k_tiles = m_pad // tm, k_pad // tk
    grid = (m_tiles, k_tiles)

    in_specs = [
        pl.BlockSpec((tm, tk), lambda i, kk: (i, kk)),            # user_items
        pl.BlockSpec((tk, h_pad), lambda i, kk: (kk, 0)),         # W1 (streamed)
        pl.BlockSpec((1, h_pad), lambda i, kk: (0, 0)),           # b1
        pl.BlockSpec((h_pad, e_dim), lambda i, kk: (0, 0)),       # W_mu
        pl.BlockSpec((h_pad, e_dim), lambda i, kk: (0, 0)),       # W_logvar
        pl.BlockSpec((1, e_dim), lambda i, kk: (0, 0)),           # b_mu
        pl.BlockSpec((1, e_dim), lambda i, kk: (0, 0)),           # b_logvar
        pl.BlockSpec((tm, e_dim), lambda i, kk: (i, 0)),          # eps
        pl.BlockSpec((tm, n_k, e_dim), lambda i, kk: (i, 0, 0)),  # item_emb
    ]
    out_specs = (
        pl.BlockSpec((tm, n_k), lambda i, kk: (i, 0)),            # score
        pl.BlockSpec((tm, e_dim), lambda i, kk: (i, 0)),          # mu
        pl.BlockSpec((tm, e_dim), lambda i, kk: (i, 0)),          # logvar
    )

    # Advisory cost estimate for XLA scheduling around the custom call.
    flops = (2 * m_pad * k_pad * h_pad
             + 2 * 2 * m_pad * h_pad * e_dim
             + 2 * m_pad * n_k * e_dim)
    bytes_accessed = (ui.size * 2 + w1.size * 2 * m_tiles
                      + 4 * (b1.size + w_mu.size + w_logvar.size
                             + b_mu.size + b_logvar.size
                             + eps_p.size + item_p.size)
                      + 4 * (m_pad * n_k + 2 * m_pad * e_dim))
    cost = pl.CostEstimate(flops=int(flops), transcendentals=int(m_pad * e_dim),
                           bytes_accessed=int(bytes_accessed))

    # Exact-ish VMEM footprint: 2x only the truly pipelined ui/W1 tiles,
    # up to 2x the constant finalize-only blocks, 1x outputs + accumulator.
    pipelined = 2 * (tm * tk * 2 + tk * h_pad * 2)                # ui, W1 (bf16)
    resident = 2 * 4 * (h_pad + 2 * h_pad * e_dim + 2 * e_dim
                        + tm * e_dim + tm * n_k * e_dim)
    outputs = 2 * 4 * (tm * n_k + 2 * tm * e_dim)
    scratch = 4 * tm * h_pad
    vmem_need = pipelined + resident + outputs + scratch + (1 << 20)
    vmem_limit = int(min(_vmem_cap_bytes(),
                         max(2 * vmem_need, 32 * 1024 * 1024)))

    score, mu, logvar = pl.pallas_call(
        _vpr_kernel,
        out_shape=(
            jax.ShapeDtypeStruct((m_pad, n_k), jnp.float32),
            jax.ShapeDtypeStruct((m_pad, e_dim), jnp.float32),
            jax.ShapeDtypeStruct((m_pad, e_dim), jnp.float32),
        ),
        grid_spec=pltpu.PrefetchScalarGridSpec(
            num_scalar_prefetch=0,
            grid=grid,
            in_specs=in_specs,
            out_specs=out_specs,
            scratch_shapes=[pltpu.VMEM((tm, h_pad), jnp.float32)],
        ),
        compiler_params=pltpu.CompilerParams(
            dimension_semantics=("parallel", "arbitrary"),
            vmem_limit_bytes=vmem_limit),
        cost_estimate=cost,
    )(ui, w1, b1, w_mu, w_logvar, b_mu, b_logvar, eps_p, item_p)

    return score[:bs], mu[:bs], logvar[:bs]


# ----------------------------- plain-JAX glue -----------------------------

def xavier_normal(key, shape):
    fan_out, fan_in = shape
    std = jnp.sqrt(2.0 / (fan_in + fan_out))
    return std * jax.random.normal(key, shape, dtype=jnp.float32)


def make_params(key, n_items, hp):
    """Parameters pre-padded only where it is free.

    n_items is padded (zero cols only ever meet zero-padded user_items
    entries); H is rounded up to a sublane multiple only; E is left as-is
    (block last dim == full array dim is legal, and item_emb / W_mu traffic
    scales with it)."""
    E, H = hp["embed_size"], hp["hidden_size_enc"]
    k_pad, _ = _choose_k_tiling(n_items)
    h_pad = _round_up(H, _SUBLANE)

    k_emb, k_w1, k_w2 = jax.random.split(key, 3)

    # torch.nn.Embedding(n_items + 1, E), xavier_normal init.
    emb = xavier_normal(k_emb, (n_items + 1, E))

    # torch Linear stores (out, in); keep (in, out) for x @ W.
    w1 = xavier_normal(k_w1, (H, n_items)).T                     # (n_items, H)
    w1 = jnp.pad(w1, ((0, k_pad - n_items), (0, h_pad - H)))
    # Intentional deviation: W1 in bf16 (exact 0/1 inputs, f32 accumulation)
    # halves the dominant HBM stream at ~1e-3 weight rounding.
    w1 = w1.astype(jnp.bfloat16)

    w2 = xavier_normal(k_w2, (2 * E, H)).T                       # (H, 2E)
    w_mu = jnp.pad(w2[:, :E], ((0, h_pad - H), (0, 0)))
    w_logvar = jnp.pad(w2[:, E:], ((0, h_pad - H), (0, 0)))

    return {
        "embed_item": emb,
        "W1": w1,
        "b1": jnp.zeros((1, h_pad), jnp.float32),
        "W_mu": w_mu,
        "W_logvar": w_logvar,
        "b_mu": jnp.zeros((1, E), jnp.float32),
        "b_logvar": jnp.zeros((1, E), jnp.float32),
    }


def vpr_forward(params, hp, user_items, item_i, item_j=None, *, noise_key):
    """Mirrors VPR.forward semantics."""
    E = hp["embed_size"]
    bs = user_items.shape[0]

    eps = jax.random.normal(noise_key, (bs, E), dtype=jnp.float32)

    # TODO(synk): embedding gather stays in plain JAX; could be fused into the
    # kernel via scalar-prefetched indices + pl.Element row blocks.
    emb_i = jnp.take(params["embed_item"], item_i, axis=0)       # (bs, k, E)
    if item_j is not None:
        emb_j = jnp.take(params["embed_item"], item_j, axis=0)
        item_emb = emb_i - emb_j
    else:
        item_emb = emb_i

    score, mu, logvar = vpr_pallas_forward(
        user_items.astype(jnp.float32),
        params["W1"], params["b1"],
        params["W_mu"], params["W_logvar"], params["b_mu"], params["b_logvar"],
        eps, item_emb)

    if item_j is not None:
        mask = item_i > 0
        return score, mask, mu, logvar
    return score


if __name__ == "__main__":
    hp = {"embed_size": 16, "hidden_size_enc": 32}
    n_items = 64
    bs, k = 4, 8

    key = jax.random.PRNGKey(0)
    k_params, k_ui, k_ii, k_ij, k_noise = jax.random.split(key, 5)

    params = make_params(k_params, n_items, hp)

    user_items = (jax.random.uniform(k_ui, (bs, n_items)) > 0.7).astype(jnp.float32)
    item_i = jax.random.randint(k_ii, (bs, k), 0, n_items + 1)
    item_j = jax.random.randint(k_ij, (bs, k), 0, n_items + 1)

    # Path 1: item_j=None -> prediction_i (bs, k)
    pred_i = vpr_forward(params, hp, user_items, item_i, noise_key=k_noise)
    pred_i = jax.block_until_ready(pred_i)
    assert pred_i.shape == (bs, k)

    # Path 2: with item_j -> (score, mask, mu, logvar)
    score, mask, mu, logvar = vpr_forward(
        params, hp, user_items, item_i, item_j, noise_key=k_noise)
    jax.block_until_ready((score, mask, mu, logvar))
    assert score.shape == (bs, k) and mask.shape == (bs, k)
    assert mu.shape == (bs, hp["embed_size"]) and logvar.shape == (bs, hp["embed_size"])

    # Lightweight numerical check against a pure-JAX reference.
    E, H = hp["embed_size"], hp["hidden_size_enc"]
    eps_ref = jax.random.normal(k_noise, (bs, E), dtype=jnp.float32)
    w1_f32 = params["W1"].astype(jnp.float32)[:n_items, :H]
    h1 = jnp.maximum(user_items @ w1_f32 + params["b1"][:, :H], 0.0)
    mu_ref = h1 @ params["W_mu"][:H, :E] + params["b_mu"]
    lv_ref = h1 @ params["W_logvar"][:H, :E] + params["b_logvar"]
    user_ref = mu_ref + jnp.exp(0.5 * lv_ref) * eps_ref
    emb = params["embed_item"]
    diff = jnp.take(emb, item_i, axis=0) - jnp.take(emb, item_j, axis=0)
    score_ref = jnp.sum(user_ref[:, None, :] * diff, axis=-1)
    assert jnp.allclose(mu, mu_ref, atol=1e-3, rtol=1e-3)
    assert jnp.allclose(logvar, lv_ref, atol=1e-3, rtol=1e-3)
    assert jnp.allclose(score, score_ref, atol=2e-3, rtol=2e-3)

    print("KERNEL_OK")
</pallas_src>

<mosaic_0001>
module attributes {stable_mosaic.version = 11 : i64} {
  func.func @_vpr_kernel(%arg0: i32, %arg1: i32, %arg2: memref<8x128xbf16, #tpu.memory_space<vmem>>, %arg3: memref<128x32xbf16, #tpu.memory_space<vmem>>, %arg4: memref<1x32xf32, #tpu.memory_space<vmem>>, %arg5: memref<32x16xf32, #tpu.memory_space<vmem>>, %arg6: memref<32x16xf32, #tpu.memory_space<vmem>>, %arg7: memref<1x16xf32, #tpu.memory_space<vmem>>, %arg8: memref<1x16xf32, #tpu.memory_space<vmem>>, %arg9: memref<8x16xf32, #tpu.memory_space<vmem>>, %arg10: memref<8x8x16xf32, #tpu.memory_space<vmem>>, %arg11: memref<8x8xf32, #tpu.memory_space<vmem>>, %arg12: memref<8x16xf32, #tpu.memory_space<vmem>>, %arg13: memref<8x16xf32, #tpu.memory_space<vmem>>, %arg14: memref<8x32xf32, #tpu.memory_space<vmem>>) attributes {dimension_semantics = [#tpu.dimension_semantics<parallel>, #tpu.dimension_semantics<arbitrary>], iteration_bounds = array<i64: 1, 1>, scalar_prefetch = 0 : i64, scratch_operands = 1 : i64, tpu.core_type = #tpu.core_type<tc>, window_params = [{transform_indices = @transform_0, window_bounds = array<i64: 8, 128>}, {transform_indices = @transform_1, window_bounds = array<i64: 128, 32>}, {pipeline_mode = #tpu.pipeline_mode<synchronous>, transform_indices = @transform_2, window_bounds = array<i64: 1, 32>}, {pipeline_mode = #tpu.pipeline_mode<synchronous>, transform_indices = @transform_3, window_bounds = array<i64: 32, 16>}, {pipeline_mode = #tpu.pipeline_mode<synchronous>, transform_indices = @transform_4, window_bounds = array<i64: 32, 16>}, {pipeline_mode = #tpu.pipeline_mode<synchronous>, transform_indices = @transform_5, window_bounds = array<i64: 1, 16>}, {pipeline_mode = #tpu.pipeline_mode<synchronous>, transform_indices = @transform_6, window_bounds = array<i64: 1, 16>}, {transform_indices = @transform_7, window_bounds = array<i64: 8, 16>}, {transform_indices = @transform_8, window_bounds = array<i64: 8, 8, 16>}, {transform_indices = @transform_9, window_bounds = array<i64: 8, 8>}, {transform_indices = @transform_10, window_bounds = array<i64: 8, 16>}, {transform_indices = @transform_11, window_bounds = array<i64: 8, 16>}]} {
    %c0_i32 = arith.constant 0 : i32
    %0 = arith.cmpi eq, %arg1, %c0_i32 : i32
    %1 = arith.extui %0 : i1 to i32
    %c0_i32_0 = arith.constant 0 : i32
    %2 = arith.cmpi ne, %1, %c0_i32_0 : i32
    scf.if %2 {
      %cst_10 = arith.constant 0.000000e+00 : f32
      %12 = vector.broadcast %cst_10 : f32 to vector<8x32xf32>
      %c0_11 = arith.constant 0 : index
      %c0_12 = arith.constant 0 : index
      %13 = vector.load %arg14[%c0_11, %c0_12] : memref<8x32xf32, #tpu.memory_space<vmem>>, vector<8x32xf32>
      tpu.vector_store %arg14[%c0_11, %c0_12], %12 {strides = array<i32>} : memref<8x32xf32, #tpu.memory_space<vmem>>, vector<8x32xf32>,
    } else {
    }
    %c0 = arith.constant 0 : index
    %c0_1 = arith.constant 0 : index
    %3 = vector.load %arg14[%c0, %c0_1] : memref<8x32xf32, #tpu.memory_space<vmem>>, vector<8x32xf32>
    %c0_2 = arith.constant 0 : index
    %c0_3 = arith.constant 0 : index
    %4 = vector.load %arg2[%c0_2, %c0_3] : memref<8x128xbf16, #tpu.memory_space<vmem>>, vector<8x128xbf16>
    %c0_4 = arith.constant 0 : index
    %c0_5 = arith.constant 0 : index
    %5 = vector.load %arg3[%c0_4, %c0_5] : memref<128x32xbf16, #tpu.memory_space<vmem>>, vector<128x32xbf16>
    %cst = arith.constant dense<0.000000e+00> : vector<8x32xf32>
    %6 = tpu.matmul %4, %5, %cst {dimension_numbers = #tpu.dot_dimension_numbers<[1], [0], [0], [1], [0, 0, 1, 1], [], []>} : vector<8x128xbf16>, vector<128x32xbf16>, vector<8x32xf32> -> vector<8x32xf32>
    %7 = arith.addf %3, %6 : vector<8x32xf32>
    %c0_6 = arith.constant 0 : index
    %c0_7 = arith.constant 0 : index
    %8 = vector.load %arg14[%c0_6, %c0_7] : memref<8x32xf32, #tpu.memory_space<vmem>>, vector<8x32xf32>
    tpu.vector_store %arg14[%c0_6, %c0_7], %7 {strides = array<i32>} : memref<8x32xf32, #tpu.memory_space<vmem>>, vector<8x32xf32>,
    %c0_i32_8 = arith.constant 0 : i32
    %9 = arith.cmpi eq, %arg1, %c0_i32_8 : i32
    %10 = arith.extui %9 : i1 to i32
    %c0_i32_9 = arith.constant 0 : i32
    %11 = arith.cmpi ne, %10, %c0_i32_9 : i32
    scf.if %11 {
      %c0_10 = arith.constant 0 : index
      %c0_11 = arith.constant 0 : index
      %12 = vector.load %arg14[%c0_10, %c0_11] : memref<8x32xf32, #tpu.memory_space<vmem>>, vector<8x32xf32>
      %c0_12 = arith.constant 0 : index
      %c0_13 = arith.constant 0 : index
      %13 = vector.load %arg4[%c0_12, %c0_13] : memref<1x32xf32, #tpu.memory_space<vmem>>, vector<1x32xf32>
      %14 = vector.broadcast %13 : vector<1x32xf32> to vector<8x32xf32>
      %15 = arith.addf %12, %14 : vector<8x32xf32>
      %cst_14 = arith.constant 0.000000e+00 : f32
      %16 = vector.broadcast %cst_14 : f32 to vector<8x32xf32>
      %17 = arith.maximumf %15, %16 : vector<8x32xf32>
      %c0_15 = arith.constant 0 : index
      %c0_16 = arith.constant 0 : index
      %18 = vector.load %arg5[%c0_15, %c0_16] : memref<32x16xf32, #tpu.memory_space<vmem>>, vector<32x16xf32>
      %cst_17 = arith.constant dense<0.000000e+00> : vector<8x16xf32>
      %19 = tpu.matmul %17, %18, %cst_17 {dimension_numbers = #tpu.dot_dimension_numbers<[1], [0], [0], [1], [0, 0, 1, 1], [], []>} : vector<8x32xf32>, vector<32x16xf32>, vector<8x16xf32> -> vector<8x16xf32>
      %c0_18 = arith.constant 0 : index
      %c0_19 = arith.constant 0 : index
      %20 = vector.load %arg7[%c0_18, %c0_19] : memref<1x16xf32, #tpu.memory_space<vmem>>, vector<1x16xf32>
      %21 = vector.broadcast %20 : vector<1x16xf32> to vector<8x16xf32>
      %22 = arith.addf %19, %21 : vector<8x16xf32>
      %c0_20 = arith.constant 0 : index
      %c0_21 = arith.constant 0 : index
      %23 = vector.load %arg6[%c0_20, %c0_21] : memref<32x16xf32, #tpu.memory_space<vmem>>, vector<32x16xf32>
      %cst_22 = arith.constant dense<0.000000e+00> : vector<8x16xf32>
      %24 = tpu.matmul %17, %23, %cst_22 {dimension_numbers = #tpu.dot_dimension_numbers<[1], [0], [0], [1], [0, 0, 1, 1], [], []>} : vector<8x32xf32>, vector<32x16xf32>, vector<8x16xf32> -> vector<8x16xf32>
      %c0_23 = arith.constant 0 : index
      %c0_24 = arith.constant 0 : index
      %25 = vector.load %arg8[%c0_23, %c0_24] : memref<1x16xf32, #tpu.memory_space<vmem>>, vector<1x16xf32>
      %26 = vector.broadcast %25 : vector<1x16xf32> to vector<8x16xf32>
      %27 = arith.addf %24, %26 : vector<8x16xf32>
      %cst_25 = arith.constant 5.000000e-01 : f32
      %28 = vector.broadcast %cst_25 : f32 to vector<8x16xf32>
      %29 = arith.mulf %28, %27 : vector<8x16xf32>
      %30 = math.exp %29 : vector<8x16xf32>
      %c0_26 = arith.constant 0 : index
      %c0_27 = arith.constant 0 : index
      %31 = vector.load %arg9[%c0_26, %c0_27] : memref<8x16xf32, #tpu.memory_space<vmem>>, vector<8x16xf32>
      %32 = arith.mulf %30, %31 : vector<8x16xf32>
      %33 = arith.addf %22, %32 : vector<8x16xf32>
      %c0_28 = arith.constant 0 : index
      %c0_29 = arith.constant 0 : index
      %c0_30 = arith.constant 0 : index
      %34 = vector.load %arg10[%c0_28, %c0_29, %c0_30] : memref<8x8x16xf32, #tpu.memory_space<vmem>>, vector<8x8x16xf32>
      %35 = vector.shape_cast %33 : vector<8x16xf32> to vector<8x1x16xf32>
      %36 = vector.broadcast %35 : vector<8x1x16xf32> to vector<8x8x16xf32>
      %37 = arith.mulf %34, %36 : vector<8x8x16xf32>
      %cst_31 = arith.constant dense<0.000000e+00> : vector<8x8xf32>
      %38 = vector.multi_reduction <add>, %37, %cst_31 [2] : vector<8x8x16xf32> to vector<8x8xf32>
      %c0_32 = arith.constant 0 : index
      %c0_33 = arith.constant 0 : index
      %39 = vector.load %arg11[%c0_32, %c0_33] : memref<8x8xf32, #tpu.memory_space<vmem>>, vector<8x8xf32>
      tpu.vector_store %arg11[%c0_32, %c0_33], %38 {strides = array<i32>} : memref<8x8xf32, #tpu.memory_space<vmem>>, vector<8x8xf32>,
      %c0_34 = arith.constant 0 : index
      %c0_35 = arith.constant 0 : index
      %40 = vector.load %arg12[%c0_34, %c0_35] : memref<8x16xf32, #tpu.memory_space<vmem>>, vector<8x16xf32>
      tpu.vector_store %arg12[%c0_34, %c0_35], %22 {strides = array<i32>} : memref<8x16xf32, #tpu.memory_space<vmem>>, vector<8x16xf32>,
      %c0_36 = arith.constant 0 : index
      %c0_37 = arith.constant 0 : index
      %41 = vector.load %arg13[%c0_36, %c0_37] : memref<8x16xf32, #tpu.memory_space<vmem>>, vector<8x16xf32>
      tpu.vector_store %arg13[%c0_36, %c0_37], %27 {strides = array<i32>} : memref<8x16xf32, #tpu.memory_space<vmem>>, vector<8x16xf32>,
    } else {
    }
    return
  }
  func.func @transform_0(%arg0: i32, %arg1: i32) -> (i32, i32) {
    %c0_i32 = arith.constant 0 : i32
    return %arg0, %arg1 : i32, i32
  }
  func.func @transform_1(%arg0: i32, %arg1: i32) -> (i32, i32) {
    %c0_i32 = arith.constant 0 : i32
    %c0_i32_0 = arith.constant 0 : i32
    return %arg1, %c0_i32 : i32, i32
  }
  func.func @transform_2(%arg0: i32, %arg1: i32) -> (i32, i32) {
    %c0_i32 = arith.constant 0 : i32
    %c0_i32_0 = arith.constant 0 : i32
    %c0_i32_1 = arith.constant 0 : i32
    return %c0_i32, %c0_i32_0 : i32, i32
  }
  func.func @transform_3(%arg0: i32, %arg1: i32) -> (i32, i32) {
    %c0_i32 = arith.constant 0 : i32
    %c0_i32_0 = arith.constant 0 : i32
    %c0_i32_1 = arith.constant 0 : i32
    return %c0_i32, %c0_i32_0 : i32, i32
  }
  func.func @transform_4(%arg0: i32, %arg1: i32) -> (i32, i32) {
    %c0_i32 = arith.constant 0 : i32
    %c0_i32_0 = arith.constant 0 : i32
    %c0_i32_1 = arith.constant 0 : i32
    return %c0_i32, %c0_i32_0 : i32, i32
  }
  func.func @transform_5(%arg0: i32, %arg1: i32) -> (i32, i32) {
    %c0_i32 = arith.constant 0 : i32
    %c0_i32_0 = arith.constant 0 : i32
    %c0_i32_1 = arith.constant 0 : i32
    return %c0_i32, %c0_i32_0 : i32, i32
  }
  func.func @transform_6(%arg0: i32, %arg1: i32) -> (i32, i32) {
    %c0_i32 = arith.constant 0 : i32
    %c0_i32_0 = arith.constant 0 : i32
    %c0_i32_1 = arith.constant 0 : i32
    return %c0_i32, %c0_i32_0 : i32, i32
  }
  func.func @transform_7(%arg0: i32, %arg1: i32) -> (i32, i32) {
    %c0_i32 = arith.constant 0 : i32
    %c0_i32_0 = arith.constant 0 : i32
    return %arg0, %c0_i32 : i32, i32
  }
  func.func @transform_8(%arg0: i32, %arg1: i32) -> (i32, i32, i32) {
    %c0_i32 = arith.constant 0 : i32
    %c0_i32_0 = arith.constant 0 : i32
    %c0_i32_1 = arith.constant 0 : i32
    return %arg0, %c0_i32, %c0_i32_0 : i32, i32, i32
  }
  func.func @transform_9(%arg0: i32, %arg1: i32) -> (i32, i32) {
    %c0_i32 = arith.constant 0 : i32
    %c0_i32_0 = arith.constant 0 : i32
    return %arg0, %c0_i32 : i32, i32
  }
  func.func @transform_10(%arg0: i32, %arg1: i32) -> (i32, i32) {
    %c0_i32 = arith.constant 0 : i32
    %c0_i32_0 = arith.constant 0 : i32
    return %arg0, %c0_i32 : i32, i32
  }
  func.func @transform_11(%arg0: i32, %arg1: i32) -> (i32, i32) {
    %c0_i32 = arith.constant 0 : i32
    %c0_i32_0 = arith.constant 0 : i32
    return %arg0, %c0_i32 : i32, i32
  }
}

</mosaic_0001>

<llo_original>
// kernel: tpu_custom_call.1
$region0: #{tpu_custom_call.1}
  #allocation0 [shape = 'u32[]', space=smem, size = 0x4, offset = 0x4, fixed_abs, tag = 'smem constant byte address 0x4 - core index']
  #allocation1 [shape = 'u32[144,128]{1,0:T(1,128)}', space=vmem, size = 0x12000, scoped, tag = 'internal scratch']
  #allocation2 [shape = 'f32[8,32]{1,0:T(8,128)}', space=vmem, size = 0x1000, scoped, tag = 'scratch operand']
  %s0 = inlined_call_operand.vmem [shape: bf16[8,128], index: 0, kind: input, shape index: {}]
  %s1 = inlined_call_operand.vmem [shape: bf16[128,32], index: 1, kind: input, shape index: {}]
  %s2 = inlined_call_operand.vmem [shape: f32[1,32], index: 2, kind: input, shape index: {}]
  %s3 = inlined_call_operand.vmem [shape: f32[32,16], index: 3, kind: input, shape index: {}]
  %s4 = inlined_call_operand.vmem [shape: f32[32,16], index: 4, kind: input, shape index: {}]
  %s5 = inlined_call_operand.vmem [shape: f32[1,16], index: 5, kind: input, shape index: {}]
  %s6 = inlined_call_operand.vmem [shape: f32[1,16], index: 6, kind: input, shape index: {}]
  %s7 = inlined_call_operand.vmem [shape: f32[8,16], index: 7, kind: input, shape index: {}]
  %s8 = inlined_call_operand.vmem [shape: f32[8,8,16], index: 8, kind: input, shape index: {}]
  %s9 = inlined_call_operand.hbm [shape: f32[8,8], index: 9, kind: output, shape index: {0}]
  %s10 = inlined_call_operand.hbm [shape: f32[8,16], index: 10, kind: output, shape index: {1}]
  %s11 = inlined_call_operand.hbm [shape: f32[8,16], index: 11, kind: output, shape index: {2}]
  %12 = xla_tuple %s9, %s10, %s11
  %s13 = sld [smem:[#allocation0]]
  $region70: #{tpu_custom_call.1} parent=0
    _
  %s15 = ssub.s32 1, %s13
  %s16 = scalar_select 0, %s15, %s13
  $region1: #{tpu_custom_call.1} parent=0
    #allocation3 [shape = 'u8[4096]{0}', space=vmem, size = 0x1000, scoped, tag = 'output window, operand 0, single buffered']
    #allocation4 [shape = 's32[1]{0}', space=sflag, size = 0x4, scoped, tag = 'scoped memory for tpu_custom_call.1']
    #allocation5 [shape = 'u8[4096]{0}', space=vmem, size = 0x1000, scoped, tag = 'output window, operand 1, single buffered']
    #allocation6 [shape = 's32[1]{0}', space=sflag, size = 0x4, scoped, tag = 'scoped memory for tpu_custom_call.1']
    #allocation7 [shape = 'u8[4096]{0}', space=vmem, size = 0x1000, scoped, tag = 'output window, operand 2, single buffered']
    %17 = vsyncpa [#allocation4], 0
    %18 = vsyncpa [#allocation6], 0
    // Predicated region
    $region2: #{tpu_custom_call.1} parent=1 // pred_check
      _
    $region3: #{tpu_custom_call.1} parent=1 // pred_check_branch
      %20 = sbr.rel (0) target = $region5
    $region4: #{tpu_custom_call.1} parent=1 // pred_region
      _
    $region5: #{tpu_custom_call.1} parent=1 // pred_fallthru
      _
    // Predicated region
    $region6: #{tpu_custom_call.1} parent=1 // pred_check
      _
    $region7: #{tpu_custom_call.1} parent=1 // pred_check_branch
      %22 = sbr.rel (0) target = $region9
    $region8: #{tpu_custom_call.1} parent=1 // pred_region
      _
    $region9: #{tpu_custom_call.1} parent=1 // pred_fallthru
      _
    // Predicated region
    $region10: #{tpu_custom_call.1} parent=1 // pred_check
      _
    $region11: #{tpu_custom_call.1} parent=1 // pred_check_branch
      %24 = sbr.rel (0) target = $region13
    $region12: #{tpu_custom_call.1} parent=1 // pred_region
      _
    $region13: #{tpu_custom_call.1} parent=1 // pred_fallthru
      _
    // Predicated region
    $region14: #{tpu_custom_call.1} parent=1 // pred_check
      _
    $region15: #{tpu_custom_call.1} parent=1 // pred_check_branch
      %26 = sbr.rel (0) target = $region17
    $region16: #{tpu_custom_call.1} parent=1 // pred_region
      _
    $region17: #{tpu_custom_call.1} parent=1 // pred_fallthru
      _
    // Predicated region
    $region18: #{tpu_custom_call.1} parent=1 // pred_check
      _
    $region19: #{tpu_custom_call.1} parent=1 // pred_check_branch
      %28 = sbr.rel (0) target = $region21
    $region20: #{tpu_custom_call.1} parent=1 // pred_region
      _
    $region21: #{tpu_custom_call.1} parent=1 // pred_fallthru
      _
    // Predicated region
    $region22: #{tpu_custom_call.1} parent=1 // pred_check
      _
    $region23: #{tpu_custom_call.1} parent=1 // pred_check_branch
      %30 = sbr.rel (0) target = $region25
    $region24: #{tpu_custom_call.1} parent=1 // pred_region
      _
    $region25: #{tpu_custom_call.1} parent=1 // pred_fallthru
      _
    // Predicated region
    $region26: #{tpu_custom_call.1} parent=1 // pred_check
      _
    $region27: #{tpu_custom_call.1} parent=1 // pred_check_branch
      %32 = sbr.rel (0) target = $region29
    $region28: #{tpu_custom_call.1} parent=1 // pred_region
      _
    $region29: #{tpu_custom_call.1} parent=1 // pred_fallthru
      _
    // Predicated region
    $region30: #{tpu_custom_call.1} parent=1 // pred_check
      _
    $region31: #{tpu_custom_call.1} parent=1 // pred_check_branch
      %34 = sbr.rel (0) target = $region33
    $region32: #{tpu_custom_call.1} parent=1 // pred_region
      _
    $region33: #{tpu_custom_call.1} parent=1 // pred_fallthru
      _
    // Predicated region
    $region34: #{tpu_custom_call.1} parent=1 // pred_check
      _
    $region35: #{tpu_custom_call.1} parent=1 // pred_check_branch
      %36 = sbr.rel (0) target = $region37
    $region36: #{tpu_custom_call.1} parent=1 // pred_region
      _
    $region37: #{tpu_custom_call.1} parent=1 // pred_fallthru
      _
    %p38 = scmp.eq.s32.totalorder 0, 0
    // Predicated region
    $region38: #{tpu_custom_call.1} parent=1 // pred_check
      %p39 = pneg %p38
    $region39: #{tpu_custom_call.1} parent=1 // pred_check_branch
      %41 = sbr.rel (%p39) target = $region41
    $region40: #{tpu_custom_call.1} parent=1 // pred_region
      %vm42 = vcmask 261120
      %43 = vst.msk [vmem:[#allocation2] sm:$0xff] %vm42, 0.0
    $region41: #{tpu_custom_call.1} parent=1 // pred_fallthru
      _
    %v44 = vld [vmem:[#allocation2] sm:$0xff]
    %v45 = vld [vmem:[%s0] sm:$0xf]
    %v46 = vld [vmem:[%s1] sm:$0xf]
    %v47 = vld [vmem:[%s1 + $0x4] sm:$0xf]
    %v48 = vld [vmem:[%s1 + $0x8] sm:$0xf]
    %v49 = vld [vmem:[%s1 + $0xc] sm:$0xf]
    %v50 = vld [vmem:[%s1 + $0x10] sm:$0xf]
    %v51 = vld [vmem:[%s1 + $0x14] sm:$0xf]
    %v52 = vld [vmem:[%s1 + $0x18] sm:$0xf]
    %v53 = vld [vmem:[%s1 + $0x1c] sm:$0xf]
    %v54 = vld [vmem:[%s1 + $0x20] sm:$0xf]
    %v55 = vld [vmem:[%s1 + $0x24] sm:$0xf]
    %v56 = vld [vmem:[%s1 + $0x28] sm:$0xf]
    %v57 = vld [vmem:[%s1 + $0x2c] sm:$0xf]
    %v58 = vld [vmem:[%s1 + $0x30] sm:$0xf]
    %v59 = vld [vmem:[%s1 + $0x34] sm:$0xf]
    %v60 = vld [vmem:[%s1 + $0x38] sm:$0xf]
    %v61 = vld [vmem:[%s1 + $0x3c] sm:$0xf]
    %v78 = vunpack.c.l.b16 %v46
    %v79 = vunpack.c.l.b16 %v47
    %v80 = vunpack.c.l.b16 %v48
    %v81 = vunpack.c.l.b16 %v49
    %v82 = vunpack.c.l.b16 %v50
    %v83 = vunpack.c.l.b16 %v51
    %v84 = vunpack.c.l.b16 %v52
    %v85 = vunpack.c.l.b16 %v53
    %v86 = vunpack.c.l.b16 %v54
    %v87 = vunpack.c.l.b16 %v55
    %v88 = vunpack.c.l.b16 %v56
    %v89 = vunpack.c.l.b16 %v57
    %v90 = vunpack.c.l.b16 %v58
    %v91 = vunpack.c.l.b16 %v59
    %v92 = vunpack.c.l.b16 %v60
    %v93 = vunpack.c.l.b16 %v61
    %v94 = vpack.c.b16 %v79, %v78
    %v95 = vpack.c.b16 %v81, %v80
    %v96 = vpack.c.b16 %v83, %v82
    %v97 = vpack.c.b16 %v85, %v84
    %v98 = vpack.c.b16 %v87, %v86
    %v99 = vpack.c.b16 %v89, %v88
    %v100 = vpack.c.b16 %v91, %v90
    %v101 = vpack.c.b16 %v93, %v92
    %110 = vmatprep.subr.bf16.mxu0 0
    %111 = vmatpush1.bf16.msra.mxu0 %v94
    %112 = vmatprep.subr.bf16.mxu0 0
    %113 = vmatpush1.bf16.msra.mxu0 %v95
    %114 = vmatprep.subr.bf16.mxu0 0
    %115 = vmatpush1.bf16.msra.mxu0 %v96
    %116 = vmatprep.subr.bf16.mxu0 0
    %117 = vmatpush1.bf16.msra.mxu0 %v97
    %118 = vmatprep.subr.bf16.mxu0 0
    %119 = vmatpush1.bf16.msra.mxu0 %v98
    %120 = vmatprep.subr.bf16.mxu0 0
    %121 = vmatpush1.bf16.msra.mxu0 %v99
    %122 = vmatprep.subr.bf16.mxu0 0
    %123 = vmatpush1.bf16.msra.mxu0 %v100
    %124 = vmatprep.subr.bf16.mxu0 0
    %125 = vmatpush1.bf16.msra.mxu0 %v101
    %126 = vmatprep.subr.bf16.mxu0 0
    %127 = vmatpush1.bf16.msra.mxu0 0
    %128 = vmatprep.subr.bf16.mxu0 0
    %129 = vmatpush1.bf16.msra.mxu0 0
    %130 = vmatprep.subr.bf16.mxu0 0
    %131 = vmatpush1.bf16.msra.mxu0 0
    %132 = vmatprep.subr.bf16.mxu0 0
    %133 = vmatpush1.bf16.msra.mxu0 0
    %134 = vmatprep.subr.bf16.mxu0 0
    %135 = vmatpush1.bf16.msra.mxu0 0
    %136 = vmatprep.subr.bf16.mxu0 0
    %137 = vmatpush1.bf16.msra.mxu0 0
    %138 = vmatprep.subr.bf16.mxu0 0
    %139 = vmatpush1.bf16.msra.mxu0 0
    %140 = vmatprep.subr.bf16.mxu0 0
    %141 = vmatpush1.bf16.msra.mxu0 0
    %142 = vmatprep.mubr.bf16.mxu0 0
    %143 = vmatmul.mubr.bf16.gmra.mrb[0].mxu0 %v45
    %v144 = vpop.f32.mrb[0].mxu0
    %v145 = vadd.f32 0.0, %v144
    %v146 = vpop.f32.mrb[0].mxu0
    %v147 = vpop.f32.mrb[0].mxu0
    %v148 = vpop.f32.mrb[0].mxu0
    %149 = vdwg.mxu0
    %v150 = vadd.f32 %v44, %v145
    %vm151 = vcmask 261120
    %152 = vst.msk [vmem:[#allocation2] sm:$0xff] %vm151, %v150
    // Predicated region
    $region42: #{tpu_custom_call.1} parent=1 // pred_check
      %p153 = pneg %p38
    $region43: #{tpu_custom_call.1} parent=1 // pred_check_branch
      %155 = sbr.rel (%p153) target = $region45
    $region44: #{tpu_custom_call.1} parent=1 // pred_region
      %v156 = vld [vmem:[#allocation2] sm:$0xff]
      %v157 = vld [vmem:[%s2] sm:$0x1]
      %v159 = vlaneseq
      %v160 = vshrl.u32 %v159, 7
      %v161 = vsub.s32 0, %v160
      %v162 = vrot.slane %v157, %v161
      %v164 = vadd.f32 %v156, %v162
      %v165 = vmax.f32 %v164, 0.0
      %v166 = vld [vmem:[%s3] sm:$0xff]
      %v167 = vld [vmem:[%s3 + $0x8] sm:$0xff]
      %v168 = vld [vmem:[%s3 + $0x10] sm:$0xff]
      %v169 = vld [vmem:[%s3 + $0x18] sm:$0xff]
      %v170 = vld [vmem:[%s5] sm:$0x1]
      %v172 = vlaneseq
      %v173 = vshrl.u32 %v172, 7
      %v174 = vsub.s32 0, %v173
      %v175 = vrot.slane %v170, %v174
      %v178 = vsel %vm151, %v165, 0
      %180 = vmatprep.subr.mxu0 0.0
      %181 = vmatpush1.msra.mxu0 %v166
      %182 = vmatprep.subr.mxu0 0.0
      %183 = vmatpush1.msra.mxu0 %v167
      %184 = vmatprep.subr.mxu0 0.0
      %185 = vmatpush1.msra.mxu0 %v168
      %186 = vmatprep.subr.mxu0 0.0
      %187 = vmatpush1.msra.mxu0 %v169
      %188 = vmatprep.subr.mxu0 0.0
      %189 = vmatpush1.msra.mxu0 0.0
      %190 = vmatprep.subr.mxu0 0.0
      %191 = vmatpush1.msra.mxu0 0.0
      %192 = vmatprep.subr.mxu0 0.0
      %193 = vmatpush1.msra.mxu0 0.0
      %194 = vmatprep.subr.mxu0 0.0
      %195 = vmatpush1.msra.mxu0 0.0
      %196 = vmatprep.subr.mxu0 0.0
      %197 = vmatpush1.msra.mxu0 0.0
      %198 = vmatprep.subr.mxu0 0.0
      %199 = vmatpush1.msra.mxu0 0.0
      %200 = vmatprep.subr.mxu0 0.0
      %201 = vmatpush1.msra.mxu0 0.0
      %202 = vmatprep.subr.mxu0 0.0
      %203 = vmatpush1.msra.mxu0 0.0
      %204 = vmatprep.subr.mxu0 0.0
      %205 = vmatpush1.msra.mxu0 0.0
      %206 = vmatprep.subr.mxu0 0.0
      %207 = vmatpush1.msra.mxu0 0.0
      %208 = vmatprep.subr.mxu0 0.0
      %209 = vmatpush1.msra.mxu0 0.0
      %210 = vmatprep.subr.mxu0 0.0
      %211 = vmatpush1.msra.mxu0 0.0
      %212 = vmatprep.subr.mxu0 0.0
      %213 = vmatpush1.msra.mxu0 0.0
      %214 = vmatprep.subr.mxu0 0.0
      %215 = vmatpush1.msra.mxu0 0.0
      %216 = vmatprep.subr.mxu0 0.0
      %217 = vmatpush1.msra.mxu0 0.0
      %218 = vmatprep.subr.mxu0 0.0
      %219 = vmatpush1.msra.mxu0 0.0
      %220 = vmatprep.subr.mxu0 0.0
      %221 = vmatpush1.msra.mxu0 0.0
      %222 = vmatprep.subr.mxu0 0.0
      %223 = vmatpush1.msra.mxu0 0.0
      %224 = vmatprep.subr.mxu0 0.0
      %225 = vmatpush1.msra.mxu0 0.0
      %226 = vmatprep.subr.mxu0 0.0
      %227 = vmatpush1.msra.mxu0 0.0
      %228 = vmatprep.subr.mxu0 0.0
      %229 = vmatpush1.msra.mxu0 0.0
      %230 = vmatprep.subr.mxu0 0.0
      %231 = vmatpush1.msra.mxu0 0.0
      %232 = vmatprep.subr.mxu0 0.0
      %233 = vmatpush1.msra.mxu0 0.0
      %234 = vmatprep.subr.mxu0 0.0
      %235 = vmatpush1.msra.mxu0 0.0
      %236 = vmatprep.subr.mxu0 0.0
      %237 = vmatpush1.msra.mxu0 0.0
      %238 = vmatprep.subr.mxu0 0.0
      %239 = vmatpush1.msra.mxu0 0.0
      %240 = vmatprep.subr.mxu0 0.0
      %241 = vmatpush1.msra.mxu0 0.0
      %242 = vmatprep.subr.mxu0 0.0
      %243 = vmatpush1.msra.mxu0 0.0
      %244 = vmatprep.mubr.f32.mxu0 0.0
      %245 = vmatmul.mubr.f32.gmra.mrb[0].mxu0 %v178
      %v246 = vpop.f32.mrb[0].mxu0
      %v247 = vadd.f32 %v175, %v246
      %v248 = vpop.f32.mrb[0].mxu0
      %249 = vdwg.mxu0
      %v250 = vld [vmem:[%s4] sm:$0xff]
      %v251 = vld [vmem:[%s4 + $0x8] sm:$0xff]
      %v252 = vld [vmem:[%s4 + $0x10] sm:$0xff]
      %v253 = vld [vmem:[%s4 + $0x18] sm:$0xff]
      %v254 = vld [vmem:[%s6] sm:$0x1]
      %v256 = vlaneseq
      %v257 = vshrl.u32 %v256, 7
      %v258 = vsub.s32 0, %v257
      %v259 = vrot.slane %v254, %v258
      %261 = vmatprep.subr.mxu0 0.0
      %262 = vmatpush1.msra.mxu0 %v250
      %263 = vmatprep.subr.mxu0 0.0
      %264 = vmatpush1.msra.mxu0 %v251
      %265 = vmatprep.subr.mxu0 0.0
      %266 = vmatpush1.msra.mxu0 %v252
      %267 = vmatprep.subr.mxu0 0.0
      %268 = vmatpush1.msra.mxu0 %v253
      %269 = vmatprep.subr.mxu0 0.0
      %270 = vmatpush1.msra.mxu0 0.0
      %271 = vmatprep.subr.mxu0 0.0
      %272 = vmatpush1.msra.mxu0 0.0
      %273 = vmatprep.subr.mxu0 0.0
      %274 = vmatpush1.msra.mxu0 0.0
      %275 = vmatprep.subr.mxu0 0.0
      %276 = vmatpush1.msra.mxu0 0.0
      %277 = vmatprep.subr.mxu0 0.0
      %278 = vmatpush1.msra.mxu0 0.0
      %279 = vmatprep.subr.mxu0 0.0
      %280 = vmatpush1.msra.mxu0 0.0
      %281 = vmatprep.subr.mxu0 0.0
      %282 = vmatpush1.msra.mxu0 0.0
      %283 = vmatprep.subr.mxu0 0.0
      %284 = vmatpush1.msra.mxu0 0.0
      %285 = vmatprep.subr.mxu0 0.0
      %286 = vmatpush1.msra.mxu0 0.0
      %287 = vmatprep.subr.mxu0 0.0
      %288 = vmatpush1.msra.mxu0 0.0
      %289 = vmatprep.subr.mxu0 0.0
      %290 = vmatpush1.msra.mxu0 0.0
      %291 = vmatprep.subr.mxu0 0.0
      %292 = vmatpush1.msra.mxu0 0.0
      %293 = vmatprep.subr.mxu0 0.0
      %294 = vmatpush1.msra.mxu0 0.0
      %295 = vmatprep.subr.mxu0 0.0
      %296 = vmatpush1.msra.mxu0 0.0
      %297 = vmatprep.subr.mxu0 0.0
      %298 = vmatpush1.msra.mxu0 0.0
      %299 = vmatprep.subr.mxu0 0.0
      %300 = vmatpush1.msra.mxu0 0.0
      %301 = vmatprep.subr.mxu0 0.0
      %302 = vmatpush1.msra.mxu0 0.0
      %303 = vmatprep.subr.mxu0 0.0
      %304 = vmatpush1.msra.mxu0 0.0
      %305 = vmatprep.subr.mxu0 0.0
      %306 = vmatpush1.msra.mxu0 0.0
      %307 = vmatprep.subr.mxu0 0.0
      %308 = vmatpush1.msra.mxu0 0.0
      %309 = vmatprep.subr.mxu0 0.0
      %310 = vmatpush1.msra.mxu0 0.0
      %311 = vmatprep.subr.mxu0 0.0
      %312 = vmatpush1.msra.mxu0 0.0
      %313 = vmatprep.subr.mxu0 0.0
      %314 = vmatpush1.msra.mxu0 0.0
      %315 = vmatprep.subr.mxu0 0.0
      %316 = vmatpush1.msra.mxu0 0.0
      %317 = vmatprep.subr.mxu0 0.0
      %318 = vmatpush1.msra.mxu0 0.0
      %319 = vmatprep.subr.mxu0 0.0
      %320 = vmatpush1.msra.mxu0 0.0
      %321 = vmatprep.subr.mxu0 0.0
      %322 = vmatpush1.msra.mxu0 0.0
      %323 = vmatprep.subr.mxu0 0.0
      %324 = vmatpush1.msra.mxu0 0.0
      %325 = vmatprep.mubr.f32.mxu0 0.0
      %326 = vmatmul.mubr.f32.gmra.mrb[0].mxu0 %v178
      %v327 = vpop.f32.mrb[0].mxu0
      %v328 = vadd.f32 %v259, %v327
      %v329 = vpop.f32.mrb[0].mxu0
      %330 = vdwg.mxu0
      %v331 = vmul.f32 %v328, 0.5
      %v332 = vmul.f32 %v331, 1.442695
      %v333 = vpow.pop %v332
      %v334 = vld [vmem:[%s7] sm:$0xff]
      %v335 = vmul.f32 %v333, %v334
      %v336 = vadd.f32 %v247, %v335
      %v337 = vld [vmem:[%s8] sm:$0xff]
      %v338 = vld [vmem:[%s8 + $0x8] sm:$0xff]
      %v339 = vld [vmem:[%s8 + $0x10] sm:$0xff]
      %v340 = vld [vmem:[%s8 + $0x18] sm:$0xff]
      %v341 = vld [vmem:[%s8 + $0x20] sm:$0xff]
      %v342 = vld [vmem:[%s8 + $0x28] sm:$0xff]
      %v343 = vld [vmem:[%s8 + $0x30] sm:$0xff]
      %v344 = vld [vmem:[%s8 + $0x38] sm:$0xff]
      %v346 = vcombine.high %v336, %v336
      %v348 = vunpack.c.l.s4 1966171168
      %v349 = vunpack.c.0.s8 %v348
      %v350 = vlaneseq
      %v351 = vshrl.u32 %v350, 7
      %v352 = vsub.s32 %v349, %v351
      %v353 = vrot.slane %v336, %v352
      %v355 = vunpack.c.l.s4 1966171168
      %v356 = vunpack.c.0.s8 %v355
      %v357 = vlaneseq
      %v358 = vshrl.u32 %v357, 7
      %v359 = vsub.s32 %v356, %v358
      %v360 = vrot.slane %v346, %v359
      %v361 = vcombine.high %v353, %v353
      %v362 = vcombine.high %v360, %v360
      %v364 = vunpack.c.l.s4 1966171168
      %v365 = vunpack.c.0.s8 %v364
      %v366 = vlaneseq
      %v367 = vshrl.u32 %v366, 7
      %v368 = vsub.s32 %v365, %v367
      %v369 = vrot.slane %v353, %v368
      %v371 = vunpack.c.l.s4 1966171168
      %v372 = vunpack.c.0.s8 %v371
      %v373 = vlaneseq
      %v374 = vshrl.u32 %v373, 7
      %v375 = vsub.s32 %v372, %v374
      %v376 = vrot.slane %v360, %v375
      %v378 = vunpack.c.l.s4 1966171168
      %v379 = vunpack.c.0.s8 %v378
      %v380 = vlaneseq
      %v381 = vshrl.u32 %v380, 7
      %v382 = vsub.s32 %v379, %v381
      %v383 = vrot.slane %v361, %v382
      %v385 = vunpack.c.l.s4 1966171168
      %v386 = vunpack.c.0.s8 %v385
      %v387 = vlaneseq
      %v388 = vshrl.u32 %v387, 7
      %v389 = vsub.s32 %v386, %v388
      %v390 = vrot.slane %v362, %v389
      %v391 = vcombine.high %v369, %v369
      %v392 = vcombine.high %v376, %v376
      %v393 = vcombine.high %v383, %v383
      %v394 = vcombine.high %v390, %v390
      %v395 = vlaneseq
      %v396 = vshrl.u32 %v395, 7
      %v397 = vsub.s32 0, %v396
      %v398 = vrot.slane %v369, %v397
      %v399 = vlaneseq
      %v400 = vshrl.u32 %v399, 7
      %v401 = vsub.s32 0, %v400
      %v402 = vrot.slane %v383, %v401
      %v403 = vlaneseq
      %v404 = vshrl.u32 %v403, 7
      %v405 = vsub.s32 0, %v404
      %v406 = vrot.slane %v391, %v405
      %v407 = vlaneseq
      %v408 = vshrl.u32 %v407, 7
      %v409 = vsub.s32 0, %v408
      %v410 = vrot.slane %v393, %v409
      %v411 = vlaneseq
      %v412 = vshrl.u32 %v411, 7
      %v413 = vsub.s32 0, %v412
      %v414 = vrot.slane %v376, %v413
      %v415 = vlaneseq
      %v416 = vshrl.u32 %v415, 7
      %v417 = vsub.s32 0, %v416
      %v418 = vrot.slane %v390, %v417
      %v419 = vlaneseq
      %v420 = vshrl.u32 %v419, 7
      %v421 = vsub.s32 0, %v420
      %v422 = vrot.slane %v392, %v421
      %v423 = vlaneseq
      %v424 = vshrl.u32 %v423, 7
      %v425 = vsub.s32 0, %v424
      %v426 = vrot.slane %v394, %v425
      %v435 = vmul.f32 %v337, %v398
      %v436 = vmul.f32 %v338, %v402
      %v437 = vmul.f32 %v339, %v406
      %v438 = vmul.f32 %v340, %v410
      %v439 = vmul.f32 %v341, %v414
      %v440 = vmul.f32 %v342, %v418
      %v441 = vmul.f32 %v343, %v422
      %v442 = vmul.f32 %v344, %v426
      %vm443 = vcmask 130048
      %v444 = vsel %vm443, %v435, 0.0
      %445 = vadd.xlane.f32.xlu0 %v444
      %v446 = vpop.xlane.xlu0 %445
      %v447 = vsel %vm443, %v436, 0.0
      %448 = vadd.xlane.f32.xlu0 %v447
      %v449 = vpop.xlane.xlu0 %448
      %v450 = vsel %vm443, %v437, 0.0
      %451 = vadd.xlane.f32.xlu0 %v450
      %v452 = vpop.xlane.xlu0 %451
      %v453 = vsel %vm443, %v438, 0.0
      %454 = vadd.xlane.f32.xlu0 %v453
      %v455 = vpop.xlane.xlu0 %454
      %v456 = vsel %vm443, %v439, 0.0
      %457 = vadd.xlane.f32.xlu0 %v456
      %v458 = vpop.xlane.xlu0 %457
      %v459 = vsel %vm443, %v440, 0.0
      %460 = vadd.xlane.f32.xlu0 %v459
      %v461 = vpop.xlane.xlu0 %460
      %v462 = vsel %vm443, %v441, 0.0
      %463 = vadd.xlane.f32.xlu0 %v462
      %v464 = vpop.xlane.xlu0 %463
      %v465 = vsel %vm443, %v442, 0.0
      %466 = vadd.xlane.f32.xlu0 %v465
      %v467 = vpop.xlane.xlu0 %466
      %v476 = vlaneseq
      %v477 = vand.u32 %v476, 127
      %v478 = vlaneseq
      %v479 = vshrl.u32 %v478, 7
      %v480 = vsub.s32 %v477, %v479
      %v481 = vrot.slane %v446, %v480
      %v482 = vlaneseq
      %v483 = vshrl.u32 %v482, 7
      %v484 = vsub.s32 %v477, %v483
      %v485 = vrot.slane %v449, %v484
      %v486 = vlaneseq
      %v487 = vshrl.u32 %v486, 7
      %v488 = vsub.s32 %v477, %v487
      %v489 = vrot.slane %v452, %v488
      %v490 = vlaneseq
      %v491 = vshrl.u32 %v490, 7
      %v492 = vsub.s32 %v477, %v491
      %v493 = vrot.slane %v455, %v492
      %v494 = vlaneseq
      %v495 = vshrl.u32 %v494, 7
      %v496 = vsub.s32 %v477, %v495
      %v497 = vrot.slane %v458, %v496
      %v498 = vlaneseq
      %v499 = vshrl.u32 %v498, 7
      %v500 = vsub.s32 %v477, %v499
      %v501 = vrot.slane %v461, %v500
      %v502 = vlaneseq
      %v503 = vshrl.u32 %v502, 7
      %v504 = vsub.s32 %v477, %v503
      %v505 = vrot.slane %v464, %v504
      %v506 = vlaneseq
      %v507 = vshrl.u32 %v506, 7
      %v508 = vsub.s32 %v477, %v507
      %v509 = vrot.slane %v467, %v508
      %vm510 = vcmask 1041409
      %v511 = vsel %vm510, %v485, %v481
      %vm512 = vcmask 1042434
      %v513 = vsel %vm512, %v489, %v511
      %vm514 = vcmask 1043459
      %v515 = vsel %vm514, %v493, %v513
      %vm516 = vcmask 1044484
      %v517 = vsel %vm516, %v497, %v515
      %vm518 = vcmask 1045509
      %v519 = vsel %vm518, %v501, %v517
      %vm520 = vcmask 1046534
      %v521 = vsel %vm520, %v505, %v519
      %vm522 = vcmask 1047559
      %v523 = vsel %vm522, %v509, %v521
      %vm525 = vcmask 64512
      %526 = vst.msk [vmem:[#allocation3] sm:$0xff] %vm525, %v523
      %527 = vst.msk [vmem:[#allocation5] sm:$0xff] %vm443, %v247
      %528 = vst.msk [vmem:[#allocation7] sm:$0xff] %vm443, %v328
    $region45: #{tpu_custom_call.1} parent=1 // pred_fallthru
      _
    // Predicated region
    $region46: #{tpu_custom_call.1} parent=1 // pred_check
      _
    $region47: #{tpu_custom_call.1} parent=1 // pred_check_branch
      %530 = sbr.rel (0) target = $region49
    $region48: #{tpu_custom_call.1} parent=1 // pred_region
      %s532 = ssub.s32 128, 128
      %533 = vsyncadd [#allocation4], %s532
      %s535 = sshll.u32 [#allocation3], 4
      %s536 = int_to_ptr.vmem [resolvable:$true] %s535
      %538 = dma.vmem_to_hbm [thread:$0]  %s536, 128, %s9, [#allocation4]
    $region49: #{tpu_custom_call.1} parent=1 // pred_fallthru
      _
    // Predicated region
    $region50: #{tpu_custom_call.1} parent=1 // pred_check
      _
    $region51: #{tpu_custom_call.1} parent=1 // pred_check_branch
      %540 = sbr.rel (0) target = $region53
    $region52: #{tpu_custom_call.1} parent=1 // pred_region
      %s542 = ssub.s32 128, 128
      %543 = vsyncadd [#allocation6], %s542
      %s545 = sshll.u32 [#allocation5], 4
      %s546 = int_to_ptr.vmem [resolvable:$true] %s545
      %548 = dma.vmem_to_hbm [thread:$0]  %s546, 128, %s10, [#allocation6]
    $region53: #{tpu_custom_call.1} parent=1 // pred_fallthru
      _
    // Predicated region
    $region54: #{tpu_custom_call.1} parent=1 // pred_check
      _
    $region55: #{tpu_custom_call.1} parent=1 // pred_check_branch
      %550 = sbr.rel (0) target = $region57
    $region56: #{tpu_custom_call.1} parent=1 // pred_region
      %s552 = ssub.s32 128, 128
      %553 = vsyncadd [#allocation6], %s552
      %s555 = sshll.u32 [#allocation7], 4
      %s556 = int_to_ptr.vmem [resolvable:$true] %s555
      %558 = dma.vmem_to_hbm [thread:$0]  %s556, 128, %s11, [#allocation6]
    $region57: #{tpu_custom_call.1} parent=1 // pred_fallthru
      _
    // Predicated region
    $region58: #{tpu_custom_call.1} parent=1 // pred_check
      _
    $region59: #{tpu_custom_call.1} parent=1 // pred_check_branch
      %560 = sbr.rel (0) target = $region61
    $region60: #{tpu_custom_call.1} parent=1 // pred_region
      %561 = dma.done [#allocation4], 128
    $region61: #{tpu_custom_call.1} parent=1 // pred_fallthru
      _
    // Predicated region
    $region62: #{tpu_custom_call.1} parent=1 // pred_check
      _
    $region63: #{tpu_custom_call.1} parent=1 // pred_check_branch
      %563 = sbr.rel (0) target = $region65
    $region64: #{tpu_custom_call.1} parent=1 // pred_region
      %564 = dma.done [#allocation6], 128
    $region65: #{tpu_custom_call.1} parent=1 // pred_fallthru
      _
    // Predicated region
    $region66: #{tpu_custom_call.1} parent=1 // pred_check
      _
    $region67: #{tpu_custom_call.1} parent=1 // pred_check_branch
      %566 = sbr.rel (0) target = $region69
    $region68: #{tpu_custom_call.1} parent=1 // pred_region
      %567 = dma.done [#allocation6], 128
    $region69: #{tpu_custom_call.1} parent=1 // pred_fallthru
      _
    %568 = vsyncpa [#allocation4], 1
    %569 = vsyncpa [#allocation6], 1

</llo_original>
